<compile_context>
chip_gen: v7x
topology: tpu7x:2x2x1
jax: 0.10.0
libtpu: 0.0.40
codegen_flags: <defaults>
</compile_context>

<pallas_src>
import jax
import jax.numpy as jnp
from jax.experimental import pallas as pl
from jax.experimental.pallas import tpu as pltpu


def _round_up(x: int, m: int) -> int:
    return ((x + m - 1) // m) * m


def _default_tb_max() -> int:
    """Rows of the similarity matrix per grid step: 256 on 2x256^2-MXU chips (v6e/v7x)."""
    try:
        kind = jax.devices()[0].device_kind.lower()
    except Exception:
        kind = ""
    if any(v in kind for v in ("v2", "v3", "v4", "v5")):
        return 128
    return 256


def triplet_margin_loss(anchors: jax.Array,
                        positives: jax.Array,
                        class_idxs: jax.Array | None = None,
                        *,
                        margin: float = 0.3,
                        similarity: str = "cosine",
                        matmul_dtype=jnp.bfloat16,
                        tb_max: int | None = None) -> jax.Array:
    """Pallas TPU implementation of TripletMarginLoss.forward. Returns a scalar."""
    assert similarity in ("dot", "cosine"), "similarity must be 'dot' or 'cosine'"
    normalize = similarity == "cosine"

    B, D = anchors.shape
    assert positives.shape == (B, D)

    # class_idxs=None  <=>  mask = ~eye  <=>  class per row = arange(B)
    if class_idxs is None:
        cls = jnp.arange(B, dtype=jnp.int32)
    else:
        cls = class_idxs.astype(jnp.int32)

    # ---- tiling -----------------------------------------------------------
    if tb_max is None:
        tb_max = _default_tb_max()
    b_pad8 = _round_up(B, 8)
    TB = b_pad8 if b_pad8 <= tb_max else tb_max
    Bp = _round_up(B, TB)
    G = Bp // TB

    kern_dtype = matmul_dtype

    # ---- single fused pre-pass: cast -> normalize -> cast -> pad ----------
    def _prep(x):
        x = x.astype(jnp.float32)
        if normalize:
            # torch.nn.functional.normalize(p=2, eps=1e-12): x / max(||x||, eps)
            # == x * rsqrt(max(sum(x^2), eps^2))  (single EUP rsqrt, no divide)
            sumsq = jnp.sum(x * x, axis=-1, keepdims=True)
            x = x * jax.lax.rsqrt(jnp.maximum(sumsq, 1e-24))
        x = x.astype(kern_dtype)
        if Bp != B:
            x = jnp.pad(x, ((0, Bp - B), (0, 0)))
        return x

    a_pad = _prep(anchors)          # (Bp, D)  row-tiled LHS
    p_pad = _prep(positives)        # (Bp, D)  row-tiled, only used for the diag row-dot
    p_t = p_pad.T                   # (D, Bp)  lane-dense resident MXU RHS

    # classes + validity sidecars (rank-1, precomputed once — no in-kernel iotas)
    cls_pad = jnp.pad(cls, (0, Bp - B), constant_values=-1) if Bp != B else cls
    bias = jnp.where(jnp.arange(Bp) < B, 0.0, -1e30).astype(jnp.float32)
    row_cls = cls_pad.reshape(Bp, 1)
    col_cls = cls_pad.reshape(1, Bp)
    row_bias = bias.reshape(Bp, 1)   # -1e30 on padded rows  -> relu(...) == 0
    col_bias = bias.reshape(1, Bp)   # -1e30 on padded cols  -> relu(...) == 0

    margin_f = float(margin)

    # ---- kernel -----------------------------------------------------------
    def kernel(a_ref, pt_ref, pd_ref, rcls_ref, ccls_ref, rbias_ref, cbias_ref, o_ref):
        a = a_ref[...]                                                # (TB, D)

        # (TB, Bp) block of the similarity matrix on the MXU, f32 accumulation.
        sim = jnp.dot(a, pt_ref[...], preferred_element_type=jnp.float32)

        # Diagonal (positive) similarities for this row-tile via an O(TB*D) row-dot
        # with the matching positives tile (elementwise math kept in f32).
        pos = jnp.sum(a.astype(jnp.float32) * pd_ref[...].astype(jnp.float32),
                      axis=-1, keepdims=True)                         # (TB, 1)

        # relu(sim - diag + margin); padded rows/cols are driven to 0 by the biases.
        loss = jnp.maximum(sim - pos + margin_f + rbias_ref[...] + cbias_ref[...], 0.0)

        # negative-mining mask: only pairs from different classes contribute
        neg_mask = rcls_ref[...] != ccls_ref[...]                      # (TB, Bp)

        partial = jnp.sum(jnp.where(neg_mask, loss, 0.0))              # scalar per tile
        o_ref[...] = jnp.broadcast_to(partial, (1, 8, 128)).astype(jnp.float32)

    out = pl.pallas_call(
        kernel,
        out_shape=jax.ShapeDtypeStruct((G, 8, 128), jnp.float32),
        grid_spec=pltpu.PrefetchScalarGridSpec(
            num_scalar_prefetch=0,
            grid=(G,),
            in_specs=[
                pl.BlockSpec((TB, D), lambda i: (i, 0)),   # anchors row-tile
                pl.BlockSpec((D, Bp), lambda i: (0, 0)),   # positives^T, resident
                pl.BlockSpec((TB, D), lambda i: (i, 0)),   # positives row-tile (diag)
                pl.BlockSpec((TB, 1), lambda i: (i, 0)),   # row classes
                pl.BlockSpec((1, Bp), lambda i: (0, 0)),   # column classes, resident
                pl.BlockSpec((TB, 1), lambda i: (i, 0)),   # row validity bias
                pl.BlockSpec((1, Bp), lambda i: (0, 0)),   # column validity bias, resident
            ],
            out_specs=pl.BlockSpec((1, 8, 128), lambda i: (i, 0, 0)),
        ),
        compiler_params=pltpu.CompilerParams(
            dimension_semantics=("parallel",),             # independent tiles -> megacore
            vmem_limit_bytes=64 * 1024 * 1024),
    )(a_pad, p_t, p_pad, row_cls, col_cls, row_bias, col_bias)

    total = jnp.sum(out[:, 0, 0])
    return total / float(B * B)


def _reference(anchors, positives, class_idxs, margin, similarity):
    """Pure-JAX mirror of the PyTorch forward."""
    a, p = anchors, positives
    if similarity == "cosine":
        a = a / jnp.maximum(jnp.linalg.norm(a, axis=-1, keepdims=True), 1e-12)
        p = p / jnp.maximum(jnp.linalg.norm(p, axis=-1, keepdims=True), 1e-12)
    sim = a @ p.T
    loss = jnp.maximum(sim - jnp.diagonal(sim)[:, None] + margin, 0.0)
    n = sim.shape[0]
    if class_idxs is not None:
        mask = class_idxs[None, :] != class_idxs[:, None]
    else:
        mask = ~jnp.eye(n, dtype=bool)
    return jnp.mean(loss * mask)


if __name__ == "__main__":
    key = jax.random.PRNGKey(0)
    k1, k2, k3, k4, k5, k6 = jax.random.split(key, 6)

    # Case 1: cosine similarity, no class indices, f32 MXU path -> tight tolerance.
    B1, D1 = 8, 128
    a1 = jax.random.normal(k1, (B1, D1), dtype=jnp.float32)
    p1 = jax.random.normal(k2, (B1, D1), dtype=jnp.float32)
    y1 = jax.block_until_ready(triplet_margin_loss(
        a1, p1, margin=0.3, similarity="cosine", matmul_dtype=jnp.float32))
    r1 = _reference(a1, p1, None, 0.3, "cosine")
    assert jnp.allclose(y1, r1, atol=1e-5, rtol=1e-5), (y1, r1)

    # Case 2: cosine + class indices, ragged B (padding + mask), default bf16 MXU path.
    B2, D2 = 10, 128
    a2 = jax.random.normal(k3, (B2, D2), dtype=jnp.float32)
    p2 = jax.random.normal(k4, (B2, D2), dtype=jnp.float32)
    cls2 = jnp.array([0, 0, 1, 1, 2, 2, 3, 3, 4, 4], dtype=jnp.int32)
    y2 = jax.block_until_ready(triplet_margin_loss(
        a2, p2, cls2, margin=0.3, similarity="cosine"))
    r2 = _reference(a2, p2, cls2, 0.3, "cosine")
    assert jnp.allclose(y2, r2, atol=2e-2, rtol=2e-2), (y2, r2)

    # Case 3: plain dot-product similarity (no normalization), f32 path.
    y3 = jax.block_until_ready(triplet_margin_loss(
        a1, p1, margin=0.3, similarity="dot", matmul_dtype=jnp.float32))
    r3 = _reference(a1, p1, None, 0.3, "dot")
    assert jnp.allclose(y3, r3, atol=1e-5, rtol=1e-5), (y3, r3)

    # Case 4: multi-step grid (tb_max=8 -> G=3) with classes, bf16 path.
    B4, D4 = 24, 128
    a4 = jax.random.normal(k5, (B4, D4), dtype=jnp.float32)
    p4 = jax.random.normal(k6, (B4, D4), dtype=jnp.float32)
    cls4 = jnp.arange(B4, dtype=jnp.int32) % 6
    y4 = jax.block_until_ready(triplet_margin_loss(
        a4, p4, cls4, margin=0.3, similarity="cosine", tb_max=8))
    r4 = _reference(a4, p4, cls4, 0.3, "cosine")
    assert jnp.allclose(y4, r4, atol=2e-2, rtol=2e-2), (y4, r4)

    print("KERNEL_OK")
</pallas_src>

<mosaic_0001>
module attributes {stable_mosaic.version = 11 : i64} {
  func.func @kernel(%arg0: i32, %arg1: memref<8x128xf32, #tpu.memory_space<vmem>>, %arg2: memref<128x8xf32, #tpu.memory_space<vmem>>, %arg3: memref<8x128xf32, #tpu.memory_space<vmem>>, %arg4: memref<8x1xi32, #tpu.memory_space<vmem>>, %arg5: memref<1x8xi32, #tpu.memory_space<vmem>>, %arg6: memref<8x1xf32, #tpu.memory_space<vmem>>, %arg7: memref<1x8xf32, #tpu.memory_space<vmem>>, %arg8: memref<1x8x128xf32, #tpu.memory_space<vmem>>) attributes {dimension_semantics = [#tpu.dimension_semantics<parallel>], iteration_bounds = array<i64: 1>, scalar_prefetch = 0 : i64, scratch_operands = 0 : i64, tpu.core_type = #tpu.core_type<tc>, window_params = [{transform_indices = @transform_0, window_bounds = array<i64: 8, 128>}, {pipeline_mode = #tpu.pipeline_mode<synchronous>, transform_indices = @transform_1, window_bounds = array<i64: 128, 8>}, {transform_indices = @transform_2, window_bounds = array<i64: 8, 128>}, {transform_indices = @transform_3, window_bounds = array<i64: 8, 1>}, {pipeline_mode = #tpu.pipeline_mode<synchronous>, transform_indices = @transform_4, window_bounds = array<i64: 1, 8>}, {transform_indices = @transform_5, window_bounds = array<i64: 8, 1>}, {pipeline_mode = #tpu.pipeline_mode<synchronous>, transform_indices = @transform_6, window_bounds = array<i64: 1, 8>}, {transform_indices = @transform_7, window_bounds = array<i64: 1, 8, 128>}]} {
    %c0 = arith.constant 0 : index
    %c0_0 = arith.constant 0 : index
    %0 = vector.load %arg1[%c0, %c0_0] : memref<8x128xf32, #tpu.memory_space<vmem>>, vector<8x128xf32>
    %c0_1 = arith.constant 0 : index
    %c0_2 = arith.constant 0 : index
    %1 = vector.load %arg2[%c0_1, %c0_2] : memref<128x8xf32, #tpu.memory_space<vmem>>, vector<128x8xf32>
    %cst = arith.constant dense<0.000000e+00> : vector<8x8xf32>
    %2 = tpu.matmul %0, %1, %cst {dimension_numbers = #tpu.dot_dimension_numbers<[1], [0], [0], [1], [0, 0, 1, 1], [], []>} : vector<8x128xf32>, vector<128x8xf32>, vector<8x8xf32> -> vector<8x8xf32>
    %c0_3 = arith.constant 0 : index
    %c0_4 = arith.constant 0 : index
    %3 = vector.load %arg3[%c0_3, %c0_4] : memref<8x128xf32, #tpu.memory_space<vmem>>, vector<8x128xf32>
    %4 = arith.mulf %0, %3 : vector<8x128xf32>
    %cst_5 = arith.constant dense<0.000000e+00> : vector<8xf32>
    %5 = vector.multi_reduction <add>, %4, %cst_5 [1] : vector<8x128xf32> to vector<8xf32>
    %6 = vector.shape_cast %5 : vector<8xf32> to vector<8x1xf32>
    %7 = vector.broadcast %6 : vector<8x1xf32> to vector<8x8xf32>
    %8 = arith.subf %2, %7 : vector<8x8xf32>
    %cst_6 = arith.constant 3.000000e-01 : f32
    %9 = vector.broadcast %cst_6 : f32 to vector<8x8xf32>
    %10 = arith.addf %8, %9 : vector<8x8xf32>
    %c0_7 = arith.constant 0 : index
    %c0_8 = arith.constant 0 : index
    %11 = vector.load %arg6[%c0_7, %c0_8] : memref<8x1xf32, #tpu.memory_space<vmem>>, vector<8x1xf32>
    %12 = vector.broadcast %11 : vector<8x1xf32> to vector<8x8xf32>
    %13 = arith.addf %10, %12 : vector<8x8xf32>
    %c0_9 = arith.constant 0 : index
    %c0_10 = arith.constant 0 : index
    %14 = vector.load %arg7[%c0_9, %c0_10] : memref<1x8xf32, #tpu.memory_space<vmem>>, vector<1x8xf32>
    %15 = vector.broadcast %14 : vector<1x8xf32> to vector<8x8xf32>
    %16 = arith.addf %13, %15 : vector<8x8xf32>
    %cst_11 = arith.constant 0.000000e+00 : f32
    %17 = vector.broadcast %cst_11 : f32 to vector<8x8xf32>
    %18 = arith.maximumf %16, %17 : vector<8x8xf32>
    %c0_12 = arith.constant 0 : index
    %c0_13 = arith.constant 0 : index
    %19 = vector.load %arg4[%c0_12, %c0_13] : memref<8x1xi32, #tpu.memory_space<vmem>>, vector<8x1xi32>
    %c0_14 = arith.constant 0 : index
    %c0_15 = arith.constant 0 : index
    %20 = vector.load %arg5[%c0_14, %c0_15] : memref<1x8xi32, #tpu.memory_space<vmem>>, vector<1x8xi32>
    %21 = vector.broadcast %19 : vector<8x1xi32> to vector<8x8xi32>
    %22 = vector.broadcast %20 : vector<1x8xi32> to vector<8x8xi32>
    %23 = arith.cmpi ne, %21, %22 : vector<8x8xi32>
    %cst_16 = arith.constant 0.000000e+00 : f32
    %24 = vector.broadcast %cst_16 : f32 to vector<8x8xf32>
    %25 = arith.select %23, %18, %24 : vector<8x8xi1>, vector<8x8xf32>
    %26 = vector.shape_cast %25 : vector<8x8xf32> to vector<1x8x8xf32>
    %cst_17 = arith.constant dense<0.000000e+00> : vector<1xf32>
    %27 = vector.multi_reduction <add>, %26, %cst_17 [1, 2] : vector<1x8x8xf32> to vector<1xf32>
    %28 = vector.shape_cast %27 : vector<1xf32> to vector<1x1x1xf32>
    %29 = vector.extract %28[0, 0, 0] : f32 from vector<1x1x1xf32>
    %30 = vector.broadcast %29 : f32 to vector<1x8x128xf32>
    %c0_18 = arith.constant 0 : index
    %c0_19 = arith.constant 0 : index
    %c0_20 = arith.constant 0 : index
    %31 = vector.load %arg8[%c0_18, %c0_19, %c0_20] : memref<1x8x128xf32, #tpu.memory_space<vmem>>, vector<1x8x128xf32>
    tpu.vector_store %arg8[%c0_18, %c0_19, %c0_20], %30 {strides = array<i32>} : memref<1x8x128xf32, #tpu.memory_space<vmem>>, vector<1x8x128xf32>,
    return
  }
  func.func @transform_0(%arg0: i32) -> (i32, i32) {
    %c0_i32 = arith.constant 0 : i32
    %c0_i32_0 = arith.constant 0 : i32
    return %arg0, %c0_i32 : i32, i32
  }
  func.func @transform_1(%arg0: i32) -> (i32, i32) {
    %c0_i32 = arith.constant 0 : i32
    %c0_i32_0 = arith.constant 0 : i32
    %c0_i32_1 = arith.constant 0 : i32
    return %c0_i32, %c0_i32_0 : i32, i32
  }
  func.func @transform_2(%arg0: i32) -> (i32, i32) {
    %c0_i32 = arith.constant 0 : i32
    %c0_i32_0 = arith.constant 0 : i32
    return %arg0, %c0_i32 : i32, i32
  }
  func.func @transform_3(%arg0: i32) -> (i32, i32) {
    %c0_i32 = arith.constant 0 : i32
    %c0_i32_0 = arith.constant 0 : i32
    return %arg0, %c0_i32 : i32, i32
  }
  func.func @transform_4(%arg0: i32) -> (i32, i32) {
    %c0_i32 = arith.constant 0 : i32
    %c0_i32_0 = arith.constant 0 : i32
    %c0_i32_1 = arith.constant 0 : i32
    return %c0_i32, %c0_i32_0 : i32, i32
  }
  func.func @transform_5(%arg0: i32) -> (i32, i32) {
    %c0_i32 = arith.constant 0 : i32
    %c0_i32_0 = arith.constant 0 : i32
    return %arg0, %c0_i32 : i32, i32
  }
  func.func @transform_6(%arg0: i32) -> (i32, i32) {
    %c0_i32 = arith.constant 0 : i32
    %c0_i32_0 = arith.constant 0 : i32
    %c0_i32_1 = arith.constant 0 : i32
    return %c0_i32, %c0_i32_0 : i32, i32
  }
  func.func @transform_7(%arg0: i32) -> (i32, i32, i32) {
    %c0_i32 = arith.constant 0 : i32
    %c0_i32_0 = arith.constant 0 : i32
    %c0_i32_1 = arith.constant 0 : i32
    return %arg0, %c0_i32, %c0_i32_0 : i32, i32, i32
  }
}

</mosaic_0001>

<llo_original>
// kernel: tpu_custom_call.1
$region0: #{tpu_custom_call.1}
  #allocation0 [shape = 'u32[]', space=smem, size = 0x4, offset = 0x4, fixed_abs, tag = 'smem constant byte address 0x4 - core index']
  #allocation1 [shape = 'u32[144,128]{1,0:T(1,128)}', space=vmem, size = 0x12000, scoped, tag = 'internal scratch']
  %s0 = inlined_call_operand.hbm [shape: f32[8,128], index: 0, kind: input, shape index: {}]
  %s1 = inlined_call_operand.hbm [shape: f32[128,8], index: 1, kind: input, shape index: {}]
  %s2 = inlined_call_operand.hbm [shape: f32[8,128], index: 2, kind: input, shape index: {}]
  %s3 = inlined_call_operand.hbm [shape: s32[8,1], index: 3, kind: input, shape index: {}]
  %s4 = inlined_call_operand.hbm [shape: s32[1,8], index: 4, kind: input, shape index: {}]
  %s5 = inlined_call_operand.hbm [shape: f32[8,1], index: 5, kind: input, shape index: {}]
  %s6 = inlined_call_operand.hbm [shape: f32[1,8], index: 6, kind: input, shape index: {}]
  %s7 = inlined_call_operand.hbm [shape: f32[1,8,128], index: 7, kind: output, shape index: {}]
  %s8 = sld [smem:[#allocation0]]
  $region66: #{tpu_custom_call.1} parent=0
    _
  %s10 = ssub.s32 1, %s8
  %s11 = scalar_select 0, %s10, %s8
  $region1: #{tpu_custom_call.1} parent=0
    #allocation2 [shape = 'u8[4096]{0}', space=vmem, size = 0x1000, scoped, tag = 'input window, operand 0, single buffered']
    #allocation3 [shape = 's32[1]{0}', space=sflag, size = 0x4, scoped, tag = 'scoped memory for tpu_custom_call.1']
    #allocation4 [shape = 's32[1]{0}', space=sflag, size = 0x4, scoped, tag = 'scoped memory for tpu_custom_call.1']
    #allocation5 [shape = 'u8[65536]{0}', space=vmem, size = 0x10000, scoped, tag = 'input window, operand 1, single buffered']
    #allocation6 [shape = 's32[1]{0}', space=sflag, size = 0x4, scoped, tag = 'scoped memory for tpu_custom_call.1']
    #allocation7 [shape = 'u8[4096]{0}', space=vmem, size = 0x1000, scoped, tag = 'input window, operand 2, single buffered']
    #allocation8 [shape = 'u8[4096]{0}', space=vmem, size = 0x1000, scoped, tag = 'input window, operand 3, single buffered']
    #allocation9 [shape = 's32[1]{0}', space=sflag, size = 0x4, scoped, tag = 'scoped memory for tpu_custom_call.1']
    #allocation10 [shape = 'u8[512]{0}', space=vmem, size = 0x400, scoped, tag = 'input window, operand 4, single buffered']
    #allocation11 [shape = 'u8[4096]{0}', space=vmem, size = 0x1000, scoped, tag = 'input window, operand 5, single buffered']
    #allocation12 [shape = 's32[1]{0}', space=sflag, size = 0x4, scoped, tag = 'scoped memory for tpu_custom_call.1']
    #allocation13 [shape = 'u8[512]{0}', space=vmem, size = 0x400, scoped, tag = 'input window, operand 6, single buffered']
    #allocation14 [shape = 'u8[4096]{0}', space=vmem, size = 0x1000, scoped, tag = 'output window, operand 0, single buffered']
    %12 = vsyncpa [#allocation3], 0
    %13 = vsyncpa [#allocation6], 0
    %14 = vsyncpa [#allocation9], 0
    %15 = vsyncpa [#allocation12], 0
    %16 = vsyncpa [#allocation4], 0
    // Predicated region
    $region2: #{tpu_custom_call.1} parent=1 // pred_check
      _
    $region3: #{tpu_custom_call.1} parent=1 // pred_check_branch
      %18 = sbr.rel (0) target = $region5
    $region4: #{tpu_custom_call.1} parent=1 // pred_region
      %s20 = ssub.s32 128, 128
      %21 = vsyncadd [#allocation3], %s20
      %s23 = sshll.u32 [#allocation2], 4
      %s24 = int_to_ptr.vmem [resolvable:$true] %s23
      %26 = dma.hbm_to_vmem [thread:$0]  %s0, 128, %s24, [#allocation3]
    $region5: #{tpu_custom_call.1} parent=1 // pred_fallthru
      _
    // Predicated region
    $region6: #{tpu_custom_call.1} parent=1 // pred_check
      _
    $region7: #{tpu_custom_call.1} parent=1 // pred_check_branch
      %28 = sbr.rel (0) target = $region9
    $region8: #{tpu_custom_call.1} parent=1 // pred_region
      %s30 = ssub.s32 2048, 2048
      %31 = vsyncadd [#allocation6], %s30
      %s32 = sshll.u32 [#allocation5], 4
      %s33 = int_to_ptr.vmem [resolvable:$true] %s32
      %38 = dma.hbm_to_vmem [thread:$0]  %s1, 2048, %s33, [#allocation6], 128, 128, 8
    $region9: #{tpu_custom_call.1} parent=1 // pred_fallthru
      _
    // Predicated region
    $region10: #{tpu_custom_call.1} parent=1 // pred_check
      _
    $region11: #{tpu_custom_call.1} parent=1 // pred_check_branch
      %40 = sbr.rel (0) target = $region13
    $region12: #{tpu_custom_call.1} parent=1 // pred_region
      %s42 = ssub.s32 128, 128
      %43 = vsyncadd [#allocation6], %s42
      %s45 = sshll.u32 [#allocation7], 4
      %s46 = int_to_ptr.vmem [resolvable:$true] %s45
      %48 = dma.hbm_to_vmem [thread:$0]  %s2, 128, %s46, [#allocation6]
    $region13: #{tpu_custom_call.1} parent=1 // pred_fallthru
      _
    // Predicated region
    $region14: #{tpu_custom_call.1} parent=1 // pred_check
      _
    $region15: #{tpu_custom_call.1} parent=1 // pred_check_branch
      %50 = sbr.rel (0) target = $region17
    $region16: #{tpu_custom_call.1} parent=1 // pred_region
      %s52 = ssub.s32 128, 128
      %53 = vsyncadd [#allocation9], %s52
      %s55 = sshll.u32 [#allocation8], 4
      %s56 = int_to_ptr.vmem [resolvable:$true] %s55
      %58 = dma.hbm_to_vmem [thread:$0]  %s3, 128, %s56, [#allocation9]
    $region17: #{tpu_custom_call.1} parent=1 // pred_fallthru
      _
    // Predicated region
    $region18: #{tpu_custom_call.1} parent=1 // pred_check
      _
    $region19: #{tpu_custom_call.1} parent=1 // pred_check_branch
      %60 = sbr.rel (0) target = $region21
    $region20: #{tpu_custom_call.1} parent=1 // pred_region
      %s62 = ssub.s32 16, 16
      %63 = vsyncadd [#allocation9], %s62
      %s65 = sshll.u32 [#allocation10], 4
      %s66 = int_to_ptr.vmem [resolvable:$true] %s65
      %68 = dma.hbm_to_vmem [thread:$0]  %s4, 16, %s66, [#allocation9]
    $region21: #{tpu_custom_call.1} parent=1 // pred_fallthru
      _
    // Predicated region
    $region22: #{tpu_custom_call.1} parent=1 // pred_check
      _
    $region23: #{tpu_custom_call.1} parent=1 // pred_check_branch
      %70 = sbr.rel (0) target = $region25
    $region24: #{tpu_custom_call.1} parent=1 // pred_region
      %s72 = ssub.s32 128, 128
      %73 = vsyncadd [#allocation12], %s72
      %s75 = sshll.u32 [#allocation11], 4
      %s76 = int_to_ptr.vmem [resolvable:$true] %s75
      %78 = dma.hbm_to_vmem [thread:$0]  %s5, 128, %s76, [#allocation12]
    $region25: #{tpu_custom_call.1} parent=1 // pred_fallthru
      _
    // Predicated region
    $region26: #{tpu_custom_call.1} parent=1 // pred_check
      _
    $region27: #{tpu_custom_call.1} parent=1 // pred_check_branch
      %80 = sbr.rel (0) target = $region29
    $region28: #{tpu_custom_call.1} parent=1 // pred_region
      %s82 = ssub.s32 16, 16
      %83 = vsyncadd [#allocation12], %s82
      %s85 = sshll.u32 [#allocation13], 4
      %s86 = int_to_ptr.vmem [resolvable:$true] %s85
      %88 = dma.hbm_to_vmem [thread:$0]  %s6, 16, %s86, [#allocation12]
    $region29: #{tpu_custom_call.1} parent=1 // pred_fallthru
      _
    // Predicated region
    $region30: #{tpu_custom_call.1} parent=1 // pred_check
      _
    $region31: #{tpu_custom_call.1} parent=1 // pred_check_branch
      %90 = sbr.rel (0) target = $region33
    $region32: #{tpu_custom_call.1} parent=1 // pred_region
      %91 = dma.done [#allocation3], 128
    $region33: #{tpu_custom_call.1} parent=1 // pred_fallthru
      _
    // Predicated region
    $region34: #{tpu_custom_call.1} parent=1 // pred_check
      _
    $region35: #{tpu_custom_call.1} parent=1 // pred_check_branch
      %93 = sbr.rel (0) target = $region37
    $region36: #{tpu_custom_call.1} parent=1 // pred_region
      %94 = dma.done [#allocation6], 2048
    $region37: #{tpu_custom_call.1} parent=1 // pred_fallthru
      _
    // Predicated region
    $region38: #{tpu_custom_call.1} parent=1 // pred_check
      _
    $region39: #{tpu_custom_call.1} parent=1 // pred_check_branch
      %96 = sbr.rel (0) target = $region41
    $region40: #{tpu_custom_call.1} parent=1 // pred_region
      %97 = dma.done [#allocation6], 128
    $region41: #{tpu_custom_call.1} parent=1 // pred_fallthru
      _
    // Predicated region
    $region42: #{tpu_custom_call.1} parent=1 // pred_check
      _
    $region43: #{tpu_custom_call.1} parent=1 // pred_check_branch
      %99 = sbr.rel (0) target = $region45
    $region44: #{tpu_custom_call.1} parent=1 // pred_region
      %100 = dma.done [#allocation9], 128
    $region45: #{tpu_custom_call.1} parent=1 // pred_fallthru
      _
    // Predicated region
    $region46: #{tpu_custom_call.1} parent=1 // pred_check
      _
    $region47: #{tpu_custom_call.1} parent=1 // pred_check_branch
      %102 = sbr.rel (0) target = $region49
    $region48: #{tpu_custom_call.1} parent=1 // pred_region
      %103 = dma.done [#allocation9], 16
    $region49: #{tpu_custom_call.1} parent=1 // pred_fallthru
      _
    // Predicated region
    $region50: #{tpu_custom_call.1} parent=1 // pred_check
      _
    $region51: #{tpu_custom_call.1} parent=1 // pred_check_branch
      %105 = sbr.rel (0) target = $region53
    $region52: #{tpu_custom_call.1} parent=1 // pred_region
      %106 = dma.done [#allocation12], 128
    $region53: #{tpu_custom_call.1} parent=1 // pred_fallthru
      _
    // Predicated region
    $region54: #{tpu_custom_call.1} parent=1 // pred_check
      _
    $region55: #{tpu_custom_call.1} parent=1 // pred_check_branch
      %108 = sbr.rel (0) target = $region57
    $region56: #{tpu_custom_call.1} parent=1 // pred_region
      %109 = dma.done [#allocation12], 16
    $region57: #{tpu_custom_call.1} parent=1 // pred_fallthru
      _
    %v110 = vld [vmem:[#allocation2] sm:$0xff]
    %v111 = vld [vmem:[#allocation5] sm:$0xff]
    %v112 = vld [vmem:[#allocation5 + $0x8] sm:$0xff]
    %v113 = vld [vmem:[#allocation5 + $0x10] sm:$0xff]
    %v114 = vld [vmem:[#allocation5 + $0x18] sm:$0xff]
    %v115 = vld [vmem:[#allocation5 + $0x20] sm:$0xff]
    %v116 = vld [vmem:[#allocation5 + $0x28] sm:$0xff]
    %v117 = vld [vmem:[#allocation5 + $0x30] sm:$0xff]
    %v118 = vld [vmem:[#allocation5 + $0x38] sm:$0xff]
    %v119 = vld [vmem:[#allocation5 + $0x40] sm:$0xff]
    %v120 = vld [vmem:[#allocation5 + $0x48] sm:$0xff]
    %v121 = vld [vmem:[#allocation5 + $0x50] sm:$0xff]
    %v122 = vld [vmem:[#allocation5 + $0x58] sm:$0xff]
    %v123 = vld [vmem:[#allocation5 + $0x60] sm:$0xff]
    %v124 = vld [vmem:[#allocation5 + $0x68] sm:$0xff]
    %v125 = vld [vmem:[#allocation5 + $0x70] sm:$0xff]
    %v126 = vld [vmem:[#allocation5 + $0x78] sm:$0xff]
    %127 = vmatprep.subr.mxu0 0.0
    %128 = vmatpush1.msra.mxu0 %v111
    %129 = vmatprep.subr.mxu0 0.0
    %130 = vmatpush1.msra.mxu0 %v112
    %131 = vmatprep.subr.mxu0 0.0
    %132 = vmatpush1.msra.mxu0 %v113
    %133 = vmatprep.subr.mxu0 0.0
    %134 = vmatpush1.msra.mxu0 %v114
    %135 = vmatprep.subr.mxu0 0.0
    %136 = vmatpush1.msra.mxu0 %v115
    %137 = vmatprep.subr.mxu0 0.0
    %138 = vmatpush1.msra.mxu0 %v116
    %139 = vmatprep.subr.mxu0 0.0
    %140 = vmatpush1.msra.mxu0 %v117
    %141 = vmatprep.subr.mxu0 0.0
    %142 = vmatpush1.msra.mxu0 %v118
    %143 = vmatprep.subr.mxu0 0.0
    %144 = vmatpush1.msra.mxu0 %v119
    %145 = vmatprep.subr.mxu0 0.0
    %146 = vmatpush1.msra.mxu0 %v120
    %147 = vmatprep.subr.mxu0 0.0
    %148 = vmatpush1.msra.mxu0 %v121
    %149 = vmatprep.subr.mxu0 0.0
    %150 = vmatpush1.msra.mxu0 %v122
    %151 = vmatprep.subr.mxu0 0.0
    %152 = vmatpush1.msra.mxu0 %v123
    %153 = vmatprep.subr.mxu0 0.0
    %154 = vmatpush1.msra.mxu0 %v124
    %155 = vmatprep.subr.mxu0 0.0
    %156 = vmatpush1.msra.mxu0 %v125
    %157 = vmatprep.subr.mxu0 0.0
    %158 = vmatpush1.msra.mxu0 %v126
    %159 = vmatprep.subr.mxu0 0.0
    %160 = vmatpush1.msra.mxu0 0.0
    %161 = vmatprep.subr.mxu0 0.0
    %162 = vmatpush1.msra.mxu0 0.0
    %163 = vmatprep.subr.mxu0 0.0
    %164 = vmatpush1.msra.mxu0 0.0
    %165 = vmatprep.subr.mxu0 0.0
    %166 = vmatpush1.msra.mxu0 0.0
    %167 = vmatprep.subr.mxu0 0.0
    %168 = vmatpush1.msra.mxu0 0.0
    %169 = vmatprep.subr.mxu0 0.0
    %170 = vmatpush1.msra.mxu0 0.0
    %171 = vmatprep.subr.mxu0 0.0
    %172 = vmatpush1.msra.mxu0 0.0
    %173 = vmatprep.subr.mxu0 0.0
    %174 = vmatpush1.msra.mxu0 0.0
    %175 = vmatprep.subr.mxu0 0.0
    %176 = vmatpush1.msra.mxu0 0.0
    %177 = vmatprep.subr.mxu0 0.0
    %178 = vmatpush1.msra.mxu0 0.0
    %179 = vmatprep.subr.mxu0 0.0
    %180 = vmatpush1.msra.mxu0 0.0
    %181 = vmatprep.subr.mxu0 0.0
    %182 = vmatpush1.msra.mxu0 0.0
    %183 = vmatprep.subr.mxu0 0.0
    %184 = vmatpush1.msra.mxu0 0.0
    %185 = vmatprep.subr.mxu0 0.0
    %186 = vmatpush1.msra.mxu0 0.0
    %187 = vmatprep.subr.mxu0 0.0
    %188 = vmatpush1.msra.mxu0 0.0
    %189 = vmatprep.subr.mxu0 0.0
    %190 = vmatpush1.msra.mxu0 0.0
    %191 = vmatprep.mubr.f32.mxu0 0.0
    %192 = vmatmul.mubr.f32.gmra.mrb[0].mxu0 %v110
    %v193 = vpop.f32.mrb[0].mxu0
    %v194 = vadd.f32 0.0, %v193
    %v195 = vpop.f32.mrb[0].mxu0
    %196 = vdwg.mxu0
    %v197 = vld [vmem:[#allocation7] sm:$0xff]
    %v198 = vmul.f32 %v110, %v197
    %199 = vadd.xlane.f32.xlu0 %v198
    %v200 = vpop.xlane.xlu0 %199
    %v201 = vsub.f32 %v194, %v200
    %v202 = vadd.f32 %v201, 0.3
    %v203 = vld [vmem:[#allocation11] sm:$0xff]
    %205 = vset.pattern.permute.xlu0 0
    %206 = vperm.xlu0 %205, %v203
    %v207 = vpop.permute.xlu0 %206
    %v209 = vadd.f32 %v202, %v207
    %v210 = vld [vmem:[#allocation13] sm:$0x1]
    %v212 = vlaneseq
    %v213 = vshrl.u32 %v212, 7
    %v214 = vsub.s32 0, %v213
    %v215 = vrot.slane %v210, %v214
    %v217 = vadd.f32 %v209, %v215
    %v218 = vmax.f32 %v217, 0.0
    %v219 = vld [vmem:[#allocation8] sm:$0xff]
    %v220 = vld [vmem:[#allocation10] sm:$0x1]
    %221 = vset.pattern.permute.xlu0 0
    %222 = vperm.xlu0 %221, %v219
    %v223 = vpop.permute.xlu0 %222
    %v224 = vlaneseq
    %v225 = vshrl.u32 %v224, 7
    %v226 = vsub.s32 0, %v225
    %v227 = vrot.slane %v220, %v226
    %vm228 = vcmp.ne.s32.totalorder %v223, %v227
    %v229 = vsel %vm228, %v218, 0.0
    %vm230 = vcmask 64512
    %v231 = vsel %vm230, %v229, 0.0
    %232 = vadd.xlane.f32.xlu0 %v231
    %v233 = vpop.xlane.xlu0 %232
    %v234 = vrot.slane %v233, 4
    %v235 = vadd.f32 %v233, %v234
    %v236 = vrot.slane %v235, 2
    %v237 = vadd.f32 %v235, %v236
    %v238 = vrot.slane %v237, 1
    %v239 = vadd.f32 %v237, %v238
    %s240 = vtos %v239
    %v241 = vstv %s240
    %242 = vst [vmem:[#allocation14] sm:$0xff] %v241
    // Predicated region
    $region58: #{tpu_custom_call.1} parent=1 // pred_check
      _
    $region59: #{tpu_custom_call.1} parent=1 // pred_check_branch
      %244 = sbr.rel (0) target = $region61
    $region60: #{tpu_custom_call.1} parent=1 // pred_region
      %s246 = ssub.s32 128, 128
      %247 = vsyncadd [#allocation4], %s246
      %s249 = sshll.u32 [#allocation14], 4
      %s250 = int_to_ptr.vmem [resolvable:$true] %s249
      %252 = dma.vmem_to_hbm [thread:$0]  %s250, 128, %s7, [#allocation4]
    $region61: #{tpu_custom_call.1} parent=1 // pred_fallthru
      _
    // Predicated region
    $region62: #{tpu_custom_call.1} parent=1 // pred_check
      _
    $region63: #{tpu_custom_call.1} parent=1 // pred_check_branch
      %254 = sbr.rel (0) target = $region65
    $region64: #{tpu_custom_call.1} parent=1 // pred_region
      %255 = dma.done [#allocation4], 128
    $region65: #{tpu_custom_call.1} parent=1 // pred_fallthru
      _
    %256 = vsyncpa [#allocation3], 1
    %257 = vsyncpa [#allocation6], 1
    %258 = vsyncpa [#allocation9], 1
    %259 = vsyncpa [#allocation12], 1
    %260 = vsyncpa [#allocation4], 1

</llo_original>
